<compile_context>
chip_gen: v7x
topology: tpu7x:2x2x1
jax: 0.10.0
libtpu: 0.0.40
codegen_flags: <defaults>
</compile_context>

<pallas_src>
import functools
import math

import jax
import jax.numpy as jnp
from jax.experimental import pallas as pl
from jax.experimental.pallas import tpu as pltpu


_HIDDEN_PAD = 256   # hidden dim (220) padded to 256 lanes; spare lane carries b3
_OUT_PAD = 128      # lane-dense output slab width; real classes = 2
OUTPUT_SIZE = 2


def _round_up(n, m):
    return (n + m - 1) // m * m


def uran_kernel(x_ref, w1b1_ref, w3b3t_ref, o_ref, *, f_in, hidden):
    """fc1+ReLU (MXU), fc3+ReLU (VPU mul + XLU lane reduce), 0.5 SE gate,
    2-class softmax rewritten as a sigmoid of half the logit difference."""
    x = x_ref[...]                                            # (B, F)

    # fc1: x @ w1 + b1, ReLU.  b1 is packed as row `f_in` of the w1 slab.
    w1 = w1b1_ref[:f_in, :]                                   # (F, Hp)
    b1 = w1b1_ref[f_in:f_in + 1, :]                           # (1, Hp)
    h = jnp.dot(x, w1, preferred_element_type=jnp.float32)    # MXU
    h = jnp.maximum(h + b1, 0.0)                              # (B, Hp)

    # Lanes >= hidden of h are exactly zero (zero-padded w1/b1, relu(0)=0).
    # Force lane `hidden` to 1.0 so that row `hidden` of the fc3 slab (== b3)
    # is picked up by the contraction below: folds the fc3 bias in for free.
    lane = jax.lax.broadcasted_iota(jnp.int32, h.shape, 1)
    h = jnp.where(lane == hidden, 1.0, h)

    # fc3: only 2 real output columns -> skip the MXU; per-class VPU multiply
    # + lane reduce against the transposed (8, Hp) weight slab (8 KiB total).
    w3t = w3b3t_ref[...]                                      # (8, Hp)
    z0 = jnp.sum(h * w3t[0:1, :], axis=1, keepdims=True)      # (B, 1)
    z1 = jnp.sum(h * w3t[1:2, :], axis=1, keepdims=True)      # (B, 1)
    z0 = jnp.maximum(z0, 0.0)                                 # relu2
    z1 = jnp.maximum(z1, 0.0)

    # SE gate: Linear(2->0,no bias)->ReLU->Linear(0->2,no bias) is identically
    # zero, so the gate is sigmoid(0) = 0.5 exactly.  For 2 classes,
    # softmax(0.5*[z0, z1]) == [sigmoid(d), 1 - sigmoid(d)] with d = 0.5*(z0-z1)
    # (numerically stable; saturates to 0/1 without NaN).  The divide is kept
    # exact to hold the 1e-5 self-test; pl.reciprocal(approx=True) is an
    # EUP-slot option at large B.
    d = 0.5 * (z0 - z1)
    p0 = 1.0 / (1.0 + jnp.exp(-d))                            # exp -> EUP
    p1 = 1.0 - p0

    # Lane-dense (B, 128) store (unmasked vst); lanes >= 2 are zero and are
    # sliced off in the wrapper (layout plumbing, not compute).
    out_lane = jax.lax.broadcasted_iota(jnp.int32, o_ref.shape, 1)
    out = jnp.where(out_lane == 0, p0, jnp.where(out_lane == 1, p1, 0.0))
    o_ref[...] = out.astype(o_ref.dtype)
    # TODO(synk): training-mode Dropout(p=0.4) (random Bernoulli mask) not
    # implemented; eval-mode (identity) semantics are used.


def uran_pack_params(w1, b1, w3, b3, h_pad=_HIDDEN_PAD):
    """One-time weight prep (call once at init, NOT per forward call):
      * w1b1  (F8, Hp): rows 0..F-1 = w1, row F = b1, remaining rows zero
        (row count rounded up to a multiple of 8 for clean sublane layout).
      * w3b3t (8,  Hp): row c = w3[:, c] with b3[c] stored at lane `hidden`,
        remaining rows/lanes zero.
    Zero padding is exact (relu(0)=0, 0*w=0).  Slabs stay f32; casting them to
    bf16 here halves weight DMA and uses the native MXU path on v6e/v7x at the
    cost of ~1e-3 relative error (would break the 1e-5 self-test below)."""
    f_in, hidden = w1.shape
    n_cls = w3.shape[1]
    assert hidden < h_pad, "need a spare zero lane in h for the fc3 bias row"

    f_rows = _round_up(f_in + 1, 8)
    w1b1 = jnp.zeros((f_rows, h_pad), jnp.float32)
    w1b1 = w1b1.at[:f_in, :hidden].set(w1.astype(jnp.float32))
    w1b1 = w1b1.at[f_in, :hidden].set(b1.astype(jnp.float32))

    c_rows = _round_up(max(n_cls, 8), 8)
    w3b3t = jnp.zeros((c_rows, h_pad), jnp.float32)
    w3b3t = w3b3t.at[:n_cls, :hidden].set(w3.T.astype(jnp.float32))
    w3b3t = w3b3t.at[:n_cls, hidden].set(b3.astype(jnp.float32))
    return w1b1, w3b3t


@functools.partial(jax.jit, static_argnames=("hidden",))
def uran_forward(x, w1b1, w3b3t, *, hidden):
    batch, f_in = x.shape
    kernel = functools.partial(uran_kernel, f_in=f_in, hidden=hidden)
    vmem = pltpu.MemorySpace.VMEM
    out_pad = pl.pallas_call(
        kernel,
        out_shape=jax.ShapeDtypeStruct((batch, _OUT_PAD), x.dtype),
        in_specs=[
            pl.BlockSpec(memory_space=vmem),   # x         (B, F)
            pl.BlockSpec(memory_space=vmem),   # [w1; b1]  (F8, Hp)
            pl.BlockSpec(memory_space=vmem),   # w3^T(+b3) (8, Hp)
        ],
        out_specs=pl.BlockSpec(memory_space=vmem),
    )(x, w1b1, w3b3t)
    return out_pad[:, :OUTPUT_SIZE]            # lane-dense slab -> (B, 2)


def uran_reference(x, w1, b1, w3, b3):
    # HIGHEST precision keeps the f32 reference f32-accurate on TPU (default
    # matmul precision may drop f32 operands to single-pass bf16).
    hp = jax.lax.Precision.HIGHEST
    h = jnp.maximum(jnp.dot(x, w1, precision=hp) + b1, 0.0)
    z = jnp.maximum(jnp.dot(h, w3, precision=hp) + b3, 0.0)
    # SE gate: Linear(2->0,bias=False)->ReLU->Linear(0->2,bias=False) == 0,
    # so gate = sigmoid(0) = 0.5 for every sample/channel.
    return jax.nn.softmax(0.5 * z, axis=1)


if __name__ == "__main__":
    # Small deterministic shapes consistent with the module:
    # x: (batch, input_size), fc1: input_size -> hidden (220), fc3: hidden -> 2.
    batch, input_size, hidden_size, output_size = 8, 32, 220, 2

    key = jax.random.PRNGKey(0)
    kx, k1, kb1, k3, kb3 = jax.random.split(key, 5)

    x = jax.random.normal(kx, (batch, input_size), dtype=jnp.float32)

    # Deterministic init mimicking PyTorch Linear defaults: U(-1/sqrt(fan_in), +).
    lim1 = 1.0 / math.sqrt(input_size)
    w1 = jax.random.uniform(k1, (input_size, hidden_size), jnp.float32, -lim1, lim1)
    b1 = jax.random.uniform(kb1, (hidden_size,), jnp.float32, -lim1, lim1)

    lim3 = 1.0 / math.sqrt(hidden_size)
    w3 = jax.random.uniform(k3, (hidden_size, output_size), jnp.float32, -lim3, lim3)
    b3 = jax.random.uniform(kb3, (output_size,), jnp.float32, -lim3, lim3)

    # One-time packing, hoisted out of the per-call jitted forward.
    w1b1, w3b3t = jax.block_until_ready(uran_pack_params(w1, b1, w3, b3))

    out = jax.block_until_ready(
        uran_forward(x, w1b1, w3b3t, hidden=hidden_size))

    ref = uran_reference(x, w1, b1, w3, b3)
    assert out.shape == (batch, output_size), out.shape
    max_err = float(jnp.max(jnp.abs(out - ref)))
    assert jnp.allclose(out, ref, atol=1e-5, rtol=1e-5), f"max |err| = {max_err}"
    assert jnp.allclose(jnp.sum(out, axis=1), 1.0, atol=1e-6)

    print("KERNEL_OK")
</pallas_src>

<mosaic_0001>
module attributes {stable_mosaic.version = 11 : i64} {
  func.func @uran_kernel(%arg0: memref<8x32xf32, #tpu.memory_space<vmem>>, %arg1: memref<40x256xf32, #tpu.memory_space<vmem>>, %arg2: memref<8x256xf32, #tpu.memory_space<vmem>>, %arg3: memref<8x128xf32, #tpu.memory_space<vmem>>) attributes {dimension_semantics = [], scalar_prefetch = 0 : i64, scratch_operands = 0 : i64, tpu.core_type = #tpu.core_type<tc>} {
    %c0 = arith.constant 0 : index
    %c0_0 = arith.constant 0 : index
    %0 = vector.load %arg0[%c0, %c0_0] : memref<8x32xf32, #tpu.memory_space<vmem>>, vector<8x32xf32>
    %c0_1 = arith.constant 0 : index
    %c0_2 = arith.constant 0 : index
    %1 = vector.load %arg1[%c0_1, %c0_2] : memref<40x256xf32, #tpu.memory_space<vmem>>, vector<32x256xf32>
    %c32 = arith.constant 32 : index
    %c0_3 = arith.constant 0 : index
    %2 = vector.load %arg1[%c32, %c0_3] : memref<40x256xf32, #tpu.memory_space<vmem>>, vector<1x256xf32>
    %cst = arith.constant dense<0.000000e+00> : vector<8x256xf32>
    %3 = tpu.matmul %0, %1, %cst {dimension_numbers = #tpu.dot_dimension_numbers<[1], [0], [0], [1], [0, 0, 1, 1], [], []>} : vector<8x32xf32>, vector<32x256xf32>, vector<8x256xf32> -> vector<8x256xf32>
    %4 = vector.broadcast %2 : vector<1x256xf32> to vector<8x256xf32>
    %5 = arith.addf %3, %4 : vector<8x256xf32>
    %cst_4 = arith.constant 0.000000e+00 : f32
    %6 = vector.broadcast %cst_4 : f32 to vector<8x256xf32>
    %7 = arith.maximumf %5, %6 : vector<8x256xf32>
    %8 = tpu.iota {dimensions = array<i32: 1>} : vector<8x256xi32>
    %c220_i32 = arith.constant 220 : i32
    %9 = vector.broadcast %c220_i32 : i32 to vector<8x256xi32>
    %10 = arith.cmpi eq, %8, %9 : vector<8x256xi32>
    %cst_5 = arith.constant 1.000000e+00 : f32
    %11 = vector.broadcast %cst_5 : f32 to vector<8x256xf32>
    %12 = arith.select %10, %11, %7 : vector<8x256xi1>, vector<8x256xf32>
    %c0_6 = arith.constant 0 : index
    %c0_7 = arith.constant 0 : index
    %13 = vector.load %arg2[%c0_6, %c0_7] : memref<8x256xf32, #tpu.memory_space<vmem>>, vector<8x256xf32>
    %14 = vector.extract_strided_slice %13 {offsets = [0, 0], sizes = [1, 256], strides = [1, 1]} : vector<8x256xf32> to vector<1x256xf32>
    %15 = vector.broadcast %14 : vector<1x256xf32> to vector<8x256xf32>
    %16 = arith.mulf %12, %15 : vector<8x256xf32>
    %cst_8 = arith.constant dense<0.000000e+00> : vector<8xf32>
    %17 = vector.multi_reduction <add>, %16, %cst_8 [1] : vector<8x256xf32> to vector<8xf32>
    %18 = vector.shape_cast %17 : vector<8xf32> to vector<8x1xf32>
    %19 = vector.extract_strided_slice %13 {offsets = [1, 0], sizes = [1, 256], strides = [1, 1]} : vector<8x256xf32> to vector<1x256xf32>
    %20 = vector.broadcast %19 : vector<1x256xf32> to vector<8x256xf32>
    %21 = arith.mulf %12, %20 : vector<8x256xf32>
    %cst_9 = arith.constant dense<0.000000e+00> : vector<8xf32>
    %22 = vector.multi_reduction <add>, %21, %cst_9 [1] : vector<8x256xf32> to vector<8xf32>
    %23 = vector.shape_cast %22 : vector<8xf32> to vector<8x1xf32>
    %cst_10 = arith.constant 0.000000e+00 : f32
    %24 = vector.broadcast %cst_10 : f32 to vector<8x1xf32>
    %25 = arith.maximumf %18, %24 : vector<8x1xf32>
    %cst_11 = arith.constant 0.000000e+00 : f32
    %26 = vector.broadcast %cst_11 : f32 to vector<8x1xf32>
    %27 = arith.maximumf %23, %26 : vector<8x1xf32>
    %28 = arith.subf %25, %27 : vector<8x1xf32>
    %cst_12 = arith.constant 5.000000e-01 : f32
    %29 = vector.broadcast %cst_12 : f32 to vector<8x1xf32>
    %30 = arith.mulf %29, %28 : vector<8x1xf32>
    %cst_13 = arith.constant 0.000000e+00 : f32
    %31 = vector.broadcast %cst_13 : f32 to vector<8x1xf32>
    %32 = arith.subf %31, %30 : vector<8x1xf32>
    %33 = math.exp %32 : vector<8x1xf32>
    %cst_14 = arith.constant 1.000000e+00 : f32
    %34 = vector.broadcast %cst_14 : f32 to vector<8x1xf32>
    %35 = arith.addf %34, %33 : vector<8x1xf32>
    %cst_15 = arith.constant 1.000000e+00 : f32
    %36 = vector.broadcast %cst_15 : f32 to vector<8x1xf32>
    %37 = arith.divf %36, %35 : vector<8x1xf32>
    %cst_16 = arith.constant 1.000000e+00 : f32
    %38 = vector.broadcast %cst_16 : f32 to vector<8x1xf32>
    %39 = arith.subf %38, %37 : vector<8x1xf32>
    %40 = tpu.iota {dimensions = array<i32: 1>} : vector<8x128xi32>
    %c0_i32 = arith.constant 0 : i32
    %41 = vector.broadcast %c0_i32 : i32 to vector<8x128xi32>
    %42 = arith.cmpi eq, %40, %41 : vector<8x128xi32>
    %c1_i32 = arith.constant 1 : i32
    %43 = vector.broadcast %c1_i32 : i32 to vector<8x128xi32>
    %44 = arith.cmpi eq, %40, %43 : vector<8x128xi32>
    %cst_17 = arith.constant 0.000000e+00 : f32
    %45 = vector.shape_cast %39 : vector<8x1xf32> to vector<8x1xf32>
    %46 = vector.broadcast %45 : vector<8x1xf32> to vector<8x128xf32>
    %47 = vector.broadcast %cst_17 : f32 to vector<8x128xf32>
    %48 = arith.select %44, %46, %47 : vector<8x128xi1>, vector<8x128xf32>
    %49 = vector.shape_cast %37 : vector<8x1xf32> to vector<8x1xf32>
    %50 = vector.broadcast %49 : vector<8x1xf32> to vector<8x128xf32>
    %51 = arith.select %42, %50, %48 : vector<8x128xi1>, vector<8x128xf32>
    %c0_18 = arith.constant 0 : index
    %c0_19 = arith.constant 0 : index
    %52 = vector.load %arg3[%c0_18, %c0_19] : memref<8x128xf32, #tpu.memory_space<vmem>>, vector<8x128xf32>
    tpu.vector_store %arg3[%c0_18, %c0_19], %51 {strides = array<i32>} : memref<8x128xf32, #tpu.memory_space<vmem>>, vector<8x128xf32>,
    return
  }
}

</mosaic_0001>

<llo_original>
// kernel: uran_forward.1
$region0: #{uran_forward.1}
  #allocation0 [shape = 'u32[]', space=smem, size = 0x4, offset = 0x4, fixed_abs, tag = 'smem constant byte address 0x4 - core index']
  #allocation1 [shape = 'u32[144,128]{1,0:T(1,128)}', space=vmem, size = 0x12000, scoped, tag = 'internal scratch']
  %s0 = inlined_call_operand.hbm [shape: f32[8,32], index: 0, kind: input, shape index: {}]
  %s1 = inlined_call_operand.hbm [shape: f32[40,256], index: 1, kind: input, shape index: {}]
  %s2 = inlined_call_operand.hbm [shape: f32[8,256], index: 2, kind: input, shape index: {}]
  %s3 = inlined_call_operand.vmem [shape: f32[8,128], index: 3, kind: output, shape index: {}]
  %s4 = sld [smem:[#allocation0]]
  $region34: #{uran_forward.1} parent=0
    _
  %s6 = ssub.s32 1, %s4
  %s7 = scalar_select 0, %s6, %s4
  $region1: #{uran_forward.1} parent=0
    #allocation2 [shape = 'u8[4096]{0}', space=vmem, size = 0x1000, scoped, tag = 'input window, operand 0, single buffered']
    #allocation3 [shape = 's32[1]{0}', space=sflag, size = 0x4, scoped, tag = 'scoped memory for uran_forward.1']
    #allocation4 [shape = 'u8[40960]{0}', space=vmem, size = 0xa000, scoped, tag = 'input window, operand 1, single buffered']
    #allocation5 [shape = 's32[1]{0}', space=sflag, size = 0x4, scoped, tag = 'scoped memory for uran_forward.1']
    #allocation6 [shape = 'u8[8192]{0}', space=vmem, size = 0x2000, scoped, tag = 'input window, operand 2, single buffered']
    %8 = vsyncpa [#allocation3], 0
    %9 = vsyncpa [#allocation5], 0
    // Predicated region
    $region2: #{uran_forward.1} parent=1 // pred_check
      _
    $region3: #{uran_forward.1} parent=1 // pred_check_branch
      %11 = sbr.rel (0) target = $region5
    $region4: #{uran_forward.1} parent=1 // pred_region
      %s13 = ssub.s32 128, 128
      %14 = vsyncadd [#allocation3], %s13
      %s16 = sshll.u32 [#allocation2], 4
      %s17 = int_to_ptr.vmem [resolvable:$true] %s16
      %19 = dma.hbm_to_vmem [thread:$0]  %s0, 128, %s17, [#allocation3]
    $region5: #{uran_forward.1} parent=1 // pred_fallthru
      _
    // Predicated region
    $region6: #{uran_forward.1} parent=1 // pred_check
      _
    $region7: #{uran_forward.1} parent=1 // pred_check_branch
      %21 = sbr.rel (0) target = $region9
    $region8: #{uran_forward.1} parent=1 // pred_region
      %s23 = ssub.s32 1280, 1280
      %24 = vsyncadd [#allocation5], %s23
      %s25 = sshll.u32 [#allocation4], 4
      %s26 = int_to_ptr.vmem [resolvable:$true] %s25
      %31 = dma.hbm_to_vmem [thread:$0]  %s1, 1280, %s26, [#allocation5], 256, 256, 16
    $region9: #{uran_forward.1} parent=1 // pred_fallthru
      _
    // Predicated region
    $region10: #{uran_forward.1} parent=1 // pred_check
      _
    $region11: #{uran_forward.1} parent=1 // pred_check_branch
      %33 = sbr.rel (0) target = $region13
    $region12: #{uran_forward.1} parent=1 // pred_region
      %s35 = ssub.s32 256, 256
      %36 = vsyncadd [#allocation5], %s35
      %s38 = sshll.u32 [#allocation6], 4
      %s39 = int_to_ptr.vmem [resolvable:$true] %s38
      %41 = dma.hbm_to_vmem [thread:$0]  %s2, 256, %s39, [#allocation5]
    $region13: #{uran_forward.1} parent=1 // pred_fallthru
      _
    // Predicated region
    $region14: #{uran_forward.1} parent=1 // pred_check
      _
    $region15: #{uran_forward.1} parent=1 // pred_check_branch
      %43 = sbr.rel (0) target = $region17
    $region16: #{uran_forward.1} parent=1 // pred_region
      %44 = dma.done [#allocation3], 128
    $region17: #{uran_forward.1} parent=1 // pred_fallthru
      _
    // Predicated region
    $region18: #{uran_forward.1} parent=1 // pred_check
      _
    $region19: #{uran_forward.1} parent=1 // pred_check_branch
      %46 = sbr.rel (0) target = $region21
    $region20: #{uran_forward.1} parent=1 // pred_region
      %47 = dma.done [#allocation5], 1280
    $region21: #{uran_forward.1} parent=1 // pred_fallthru
      _
    // Predicated region
    $region22: #{uran_forward.1} parent=1 // pred_check
      _
    $region23: #{uran_forward.1} parent=1 // pred_check_branch
      %49 = sbr.rel (0) target = $region25
    $region24: #{uran_forward.1} parent=1 // pred_region
      %50 = dma.done [#allocation5], 256
    $region25: #{uran_forward.1} parent=1 // pred_fallthru
      _
    %v51 = vld [vmem:[#allocation2] sm:$0xff]
    %v52 = vld [vmem:[#allocation4] sm:$0xff]
    %v53 = vld [vmem:[#allocation4 + $0x8] sm:$0xff]
    %v54 = vld [vmem:[#allocation4 + $0x10] sm:$0xff]
    %v55 = vld [vmem:[#allocation4 + $0x18] sm:$0xff]
    %v56 = vld [vmem:[#allocation4 + $0x20] sm:$0xff]
    %v57 = vld [vmem:[#allocation4 + $0x28] sm:$0xff]
    %v58 = vld [vmem:[#allocation4 + $0x30] sm:$0xff]
    %v59 = vld [vmem:[#allocation4 + $0x38] sm:$0xff]
    %s60 = scalar_lea.vmem [#allocation4], 64
    %v61 = vld [vmem:[%s60] ss:$8 sm:$0x3]
    %v63 = vlaneseq
    %v64 = vshrl.u32 %v63, 7
    %v65 = vsub.s32 0, %v64
    %v66 = vrot.slane %v61, %v65
    %v67 = vlaneseq
    %v68 = vshrl.u32 %v67, 7
    %v69 = vsub.s32 1, %v68
    %v70 = vrot.slane %v61, %v69
    %vm73 = vcmask 261120
    %v75 = vsel %vm73, %v51, 0
    %77 = vmatprep.subr.mxu0 %v53
    %78 = vmatpush1.msra.mxu0 %v52
    %79 = vmatprep.subr.mxu0 %v55
    %80 = vmatpush1.msra.mxu0 %v54
    %81 = vmatprep.subr.mxu0 %v57
    %82 = vmatpush1.msra.mxu0 %v56
    %83 = vmatprep.subr.mxu0 %v59
    %84 = vmatpush1.msra.mxu0 %v58
    %85 = vmatprep.subr.mxu0 0.0
    %86 = vmatpush1.msra.mxu0 0.0
    %87 = vmatprep.subr.mxu0 0.0
    %88 = vmatpush1.msra.mxu0 0.0
    %89 = vmatprep.subr.mxu0 0.0
    %90 = vmatpush1.msra.mxu0 0.0
    %91 = vmatprep.subr.mxu0 0.0
    %92 = vmatpush1.msra.mxu0 0.0
    %93 = vmatprep.subr.mxu0 0.0
    %94 = vmatpush1.msra.mxu0 0.0
    %95 = vmatprep.subr.mxu0 0.0
    %96 = vmatpush1.msra.mxu0 0.0
    %97 = vmatprep.subr.mxu0 0.0
    %98 = vmatpush1.msra.mxu0 0.0
    %99 = vmatprep.subr.mxu0 0.0
    %100 = vmatpush1.msra.mxu0 0.0
    %101 = vmatprep.subr.mxu0 0.0
    %102 = vmatpush1.msra.mxu0 0.0
    %103 = vmatprep.subr.mxu0 0.0
    %104 = vmatpush1.msra.mxu0 0.0
    %105 = vmatprep.subr.mxu0 0.0
    %106 = vmatpush1.msra.mxu0 0.0
    %107 = vmatprep.subr.mxu0 0.0
    %108 = vmatpush1.msra.mxu0 0.0
    %109 = vmatprep.subr.mxu0 0.0
    %110 = vmatpush1.msra.mxu0 0.0
    %111 = vmatprep.subr.mxu0 0.0
    %112 = vmatpush1.msra.mxu0 0.0
    %113 = vmatprep.subr.mxu0 0.0
    %114 = vmatpush1.msra.mxu0 0.0
    %115 = vmatprep.subr.mxu0 0.0
    %116 = vmatpush1.msra.mxu0 0.0
    %117 = vmatprep.subr.mxu0 0.0
    %118 = vmatpush1.msra.mxu0 0.0
    %119 = vmatprep.subr.mxu0 0.0
    %120 = vmatpush1.msra.mxu0 0.0
    %121 = vmatprep.subr.mxu0 0.0
    %122 = vmatpush1.msra.mxu0 0.0
    %123 = vmatprep.subr.mxu0 0.0
    %124 = vmatpush1.msra.mxu0 0.0
    %125 = vmatprep.subr.mxu0 0.0
    %126 = vmatpush1.msra.mxu0 0.0
    %127 = vmatprep.subr.mxu0 0.0
    %128 = vmatpush1.msra.mxu0 0.0
    %129 = vmatprep.subr.mxu0 0.0
    %130 = vmatpush1.msra.mxu0 0.0
    %131 = vmatprep.subr.mxu0 0.0
    %132 = vmatpush1.msra.mxu0 0.0
    %133 = vmatprep.subr.mxu0 0.0
    %134 = vmatpush1.msra.mxu0 0.0
    %135 = vmatprep.subr.mxu0 0.0
    %136 = vmatpush1.msra.mxu0 0.0
    %137 = vmatprep.subr.mxu0 0.0
    %138 = vmatpush1.msra.mxu0 0.0
    %139 = vmatprep.subr.mxu0 0.0
    %140 = vmatpush1.msra.mxu0 0.0
    %141 = vmatprep.mubr.f32.mxu0 0.0
    %142 = vmatmul.mubr.f32.gmra.mrb[0].mxu0 %v75
    %v143 = vpop.f32.mrb[0].mxu0
    %v144 = vadd.f32 %v66, %v143
    %v145 = vpop.f32.mrb[0].mxu0
    %v146 = vadd.f32 %v70, %v145
    %147 = vdwg.mxu0
    %v148 = vmax.f32 %v144, 0.0
    %v149 = vmax.f32 %v146, 0.0
    %v150 = vlaneseq
    %v151 = vand.u32 %v150, 127
    %v152 = vadd.s32 %v151, 128
    %vm153 = vcmp.eq.s32.totalorder %v151, 220
    %vm154 = vcmp.eq.s32.totalorder %v152, 220
    %v155 = vsel %vm153, 1.0, %v148
    %v156 = vsel %vm154, 1.0, %v149
    %v157 = vld [vmem:[#allocation6] sm:$0xff]
    %v158 = vld [vmem:[#allocation6 + $0x8] sm:$0xff]
    %v159 = vlaneseq
    %v160 = vshrl.u32 %v159, 7
    %v161 = vsub.s32 0, %v160
    %v162 = vrot.slane %v157, %v161
    %v163 = vlaneseq
    %v164 = vshrl.u32 %v163, 7
    %v165 = vsub.s32 0, %v164
    %v166 = vrot.slane %v158, %v165
    %v167 = vmul.f32 %v155, %v162
    %v168 = vmul.f32 %v156, %v166
    %v169 = vadd.f32 %v167, %v168
    %170 = vadd.xlane.f32.xlu0 %v169
    %v171 = vpop.xlane.xlu0 %170
    %v172 = vlaneseq
    %v173 = vshrl.u32 %v172, 7
    %v174 = vsub.s32 1, %v173
    %v175 = vrot.slane %v157, %v174
    %v176 = vlaneseq
    %v177 = vshrl.u32 %v176, 7
    %v178 = vsub.s32 1, %v177
    %v179 = vrot.slane %v158, %v178
    %v180 = vmul.f32 %v155, %v175
    %v181 = vmul.f32 %v156, %v179
    %v182 = vadd.f32 %v180, %v181
    %183 = vadd.xlane.f32.xlu0 %v182
    %v184 = vpop.xlane.xlu0 %183
    %v185 = vmax.f32 %v171, 0.0
    %v186 = vmax.f32 %v184, 0.0
    %v187 = vsub.f32 %v185, %v186
    %v188 = vmul.f32 %v187, 0.5
    %v189 = vsub.f32 0.0, %v188
    %v190 = vmul.f32 %v189, 1.442695
    %v191 = vpow.pop %v190
    %v192 = vadd.f32 %v191, 1.0
    %v193 = vrcp.pop %v192
    %v194 = vmul.f32 1.0, %v193
    %v195 = vsub.f32 1.0, %v194
    %vm196 = vcmp.eq.s32.totalorder %v151, 0
    %vm197 = vcmp.eq.s32.totalorder %v151, 1
    %v198 = vsel %vm197, %v195, 0.0
    %v199 = vsel %vm196, %v194, %v198
    %200 = vst [vmem:[%s3] sm:$0xff] %v199
    // Predicated region
    $region26: #{uran_forward.1} parent=1 // pred_check
      _
    $region27: #{uran_forward.1} parent=1 // pred_check_branch
      %202 = sbr.rel (0) target = $region29
    $region28: #{uran_forward.1} parent=1 // pred_region
      _
    $region29: #{uran_forward.1} parent=1 // pred_fallthru
      _
    // Predicated region
    $region30: #{uran_forward.1} parent=1 // pred_check
      _
    $region31: #{uran_forward.1} parent=1 // pred_check_branch
      %204 = sbr.rel (0) target = $region33
    $region32: #{uran_forward.1} parent=1 // pred_region
      _
    $region33: #{uran_forward.1} parent=1 // pred_fallthru
      _
    %205 = vsyncpa [#allocation3], 1
    %206 = vsyncpa [#allocation5], 1

</llo_original>
